<compile_context>
chip_gen: v5e
topology: v5e:2x2
jax: 0.10.0
libtpu: 0.0.40
codegen_flags: <defaults>
</compile_context>

<pallas_src>
import functools
import math

import numpy as np

import jax
import jax.numpy as jnp
from jax.experimental import pallas as pl
from jax.experimental.pallas import tpu as pltpu


# ------------------------------ Pallas kernel -------------------------------

def down_conv_block_kernel(x_ref, w_ref, b_ref, o_ref, *, H, Hp, ipb):
    """One grid step = `ipb` images stacked along the row (sublane) axis.

    x_ref: (ipb*Hp, (W+2)*Cin)        bf16  lane-interleaved, zero-padded rows
    w_ref: (2, 3, (W+2)*Cin, Cout*Wh) bf16  banded conv weights
                                      [pool parity, kernel row dy, in lane, out col]
    b_ref: (1, Cout*Wh)               f32   bias broadcast over output columns
    o_ref: (ipb*Hh, Cout*Wh)          f32   pooled ReLU output, rows = (image, hh)
    """
    # Number of conv-output rows computed for the whole stacked block.  Each
    # image carries its own 2 zero-pad rows, so dy-shifted rows never mix data
    # from two different images at any valid output row.
    M = ipb * Hp - 2
    xs = [x_ref[dy:dy + M, :] for dy in range(3)]      # three dy-shifted row views

    def band_matmul(parity):                           # conv for w_out = 2*wh + parity
        acc = jnp.dot(xs[0], w_ref[parity, 0], preferred_element_type=jnp.float32)
        acc += jnp.dot(xs[1], w_ref[parity, 1], preferred_element_type=jnp.float32)
        acc += jnp.dot(xs[2], w_ref[parity, 2], preferred_element_type=jnp.float32)
        return acc                                     # (M, Cout*Wh) f32

    # W-direction 2-max-pool == elementwise max of the even/odd column groups.
    z = jnp.maximum(band_matmul(0), band_matmul(1))
    z = jnp.maximum(z + b_ref[...], 0.0)               # bias + ReLU (f32 VPU)

    # H-direction 2-max-pool: row-pair maximum, per image (static unrolled loop).
    Hh = H // 2
    for i in range(ipb):
        zi = z[i * Hp:i * Hp + H]                      # (H, Cout*Wh) valid rows, image i
        zi = zi.reshape(Hh, 2, zi.shape[-1])
        o_ref[i * Hh:(i + 1) * Hh, :] = jnp.maximum(zi[:, 0, :], zi[:, 1, :])


# --------------------------- parameter repacking ------------------------------

def pack_params(w_oihw, bias, W):
    """Pack Conv2d weight (Cout,Cin,3,3) + bias into banded matmul form.

    w_banded[p, dy, (2*wh + p + dx)*Cin + ci, co*Wh + wh] = w_oihw[co, ci, dy, dx]
    bias_row[0, co*Wh + wh]                               = bias[co]

    In a real model this runs once at parameter-load time, not per forward.
    """
    Cout, Cin = int(w_oihw.shape[0]), int(w_oihw.shape[1])
    Wh = W // 2
    lanes_in = (W + 2) * Cin
    cols_out = Cout * Wh

    p, dy, dx, ci, co, wh = np.meshgrid(
        np.arange(2), np.arange(3), np.arange(3), np.arange(Cin),
        np.arange(Cout), np.arange(Wh), indexing="ij")
    rows = (2 * wh + p + dx) * Cin + ci                 # banded row placement
    cols = co * Wh + wh                                 # output column (co-major)

    w_banded = jnp.zeros((2, 3, lanes_in, cols_out), jnp.float32)
    w_banded = w_banded.at[p, dy, rows, cols].set(w_oihw[co, ci, dy, dx])
    bias_row = jnp.repeat(bias.astype(jnp.float32), Wh).reshape(1, cols_out)
    return w_banded.astype(jnp.bfloat16), bias_row


# ------------------------------ call wrapper ---------------------------------

def down_conv_block(x_nchw, w_oihw, bias, *, num_blocks=1):
    """DownConvBlock.forward: x (N,Cin,H,W) -> (N,Cout,H//2,W//2).

    num_blocks=1: whole batch folded into one grid step (v5e/v6e, single TC).
    num_blocks=2: shard the batch across the two TensorCores on v7x.
    """
    N, Cin, H, W = x_nchw.shape
    Cout = int(w_oihw.shape[0])
    # TODO(synk): odd H/W (PyTorch MaxPool2d(2) floors the pooled size) is not handled.
    assert H % 2 == 0 and W % 2 == 0, "even spatial sizes required"
    assert N % num_blocks == 0
    ipb = N // num_blocks                               # images per grid step
    Hp, Hh, Wh = H + 2, H // 2, W // 2
    lanes_in = (W + 2) * Cin
    cols_out = Cout * Wh

    # Input packing: NCHW -> lane-dense (w,ci)-interleaved bf16 with zero padding.
    # xi[n, h+1, (w+1)*Cin + ci] = x[n, ci, h, w]; fuses into 1-2 tiny XLA ops.
    xi = jnp.transpose(x_nchw, (0, 2, 3, 1)).reshape(N, H, W * Cin)
    xi = jnp.pad(xi, ((0, 0), (1, 1), (Cin, Cin))).astype(jnp.bfloat16)
    xi = xi.reshape(num_blocks, ipb * Hp, lanes_in)

    w_banded, bias_row = pack_params(w_oihw, bias, W)

    kern = functools.partial(down_conv_block_kernel, H=H, Hp=Hp, ipb=ipb)
    y = pl.pallas_call(
        kern,
        out_shape=jax.ShapeDtypeStruct((num_blocks, ipb * Hh, cols_out), jnp.float32),
        grid=(num_blocks,),
        in_specs=[
            pl.BlockSpec((None, ipb * Hp, lanes_in), lambda b: (b, 0, 0)),
            pl.BlockSpec((2, 3, lanes_in, cols_out), lambda b: (0, 0, 0, 0)),
            pl.BlockSpec((1, cols_out), lambda b: (0, 0)),
        ],
        out_specs=pl.BlockSpec((None, ipb * Hh, cols_out), lambda b: (b, 0, 0)),
        compiler_params=pltpu.CompilerParams(dimension_semantics=("parallel",)),
    )(xi, w_banded, bias_row)

    # Output columns are co*Wh + wh -> restore PyTorch NCHW (free reshape + one
    # tiny transpose of the 4 KB result).
    y = y.reshape(N, Hh, Cout, Wh)
    return jnp.transpose(y, (0, 2, 1, 3))


# ------------------------- reference + parameter init ------------------------

def reference_forward(x, w, b):
    """Pure-JAX f32 reference of DownConvBlock.forward."""
    y = jax.lax.conv_general_dilated(x, w, (1, 1), ((1, 1), (1, 1)),
                                     dimension_numbers=("NCHW", "OIHW", "NCHW"))
    y = jnp.maximum(y + b[None, :, None, None], 0.0)
    return jax.lax.reduce_window(y, -jnp.inf, jax.lax.max,
                                 (1, 1, 2, 2), (1, 1, 2, 2), "VALID")


def init_params(key, in_channels, out_channels):
    """PyTorch Conv2d default-style uniform init."""
    bound = 1.0 / math.sqrt(in_channels * 9)
    kw, kb = jax.random.split(key)
    w = jax.random.uniform(kw, (out_channels, in_channels, 3, 3),
                           jnp.float32, -bound, bound)
    b = jax.random.uniform(kb, (out_channels,), jnp.float32, -bound, bound)
    return w, b


# ----------------------------------- main ------------------------------------

if __name__ == "__main__":
    N, Cin, H, W = 2, 4, 16, 16     # batch=2, channels=4, spatial=16
    Cout = 8

    key = jax.random.PRNGKey(0)
    key, kx, kp = jax.random.split(key, 3)
    x = jax.random.normal(kx, (N, Cin, H, W), jnp.float32)
    w, b = init_params(kp, Cin, Cout)

    out = jax.jit(down_conv_block)(x, w, b)
    out = jax.block_until_ready(out)

    assert out.shape == (N, Cout, H // 2, W // 2), out.shape
    assert out.dtype == jnp.float32

    # bf16 activations/weights on the MXU (f32 accumulation) -> ~1e-2 abs error.
    ref = reference_forward(x, w, b)
    max_err = float(jnp.max(jnp.abs(out - ref)))
    assert max_err < 0.05, f"max abs error {max_err}"

    print("KERNEL_OK")
</pallas_src>

<mosaic_0001>
module attributes {stable_mosaic.version = 11 : i64} {
  func.func @down_conv_block_kernel(%arg0: i32, %arg1: memref<1x36x72xbf16, #tpu.memory_space<vmem>>, %arg2: memref<2x3x72x64xbf16, #tpu.memory_space<vmem>>, %arg3: memref<1x64xf32, #tpu.memory_space<vmem>>, %arg4: memref<1x16x64xf32, #tpu.memory_space<vmem>>) attributes {dimension_semantics = [#tpu.dimension_semantics<parallel>], iteration_bounds = array<i64: 1>, scalar_prefetch = 0 : i64, scratch_operands = 0 : i64, tpu.core_type = #tpu.core_type<tc>, window_params = [{transform_indices = @transform_0, window_bounds = array<i64: 1, 36, 72>}, {pipeline_mode = #tpu.pipeline_mode<synchronous>, transform_indices = @transform_1, window_bounds = array<i64: 2, 3, 72, 64>}, {pipeline_mode = #tpu.pipeline_mode<synchronous>, transform_indices = @transform_2, window_bounds = array<i64: 1, 64>}, {transform_indices = @transform_3, window_bounds = array<i64: 1, 16, 64>}]} {
    %c0 = arith.constant 0 : index
    %c0_0 = arith.constant 0 : index
    %c0_1 = arith.constant 0 : index
    %0 = vector.load %arg1[%c0, %c0_0, %c0_1] : memref<1x36x72xbf16, #tpu.memory_space<vmem>>, vector<1x34x72xbf16>
    %1 = vector.shape_cast %0 : vector<1x34x72xbf16> to vector<34x72xbf16>
    %c0_2 = arith.constant 0 : index
    %c1 = arith.constant 1 : index
    %c0_3 = arith.constant 0 : index
    %2 = vector.load %arg1[%c0_2, %c1, %c0_3] : memref<1x36x72xbf16, #tpu.memory_space<vmem>>, vector<1x34x72xbf16>
    %3 = vector.shape_cast %2 : vector<1x34x72xbf16> to vector<34x72xbf16>
    %c0_4 = arith.constant 0 : index
    %c2 = arith.constant 2 : index
    %c0_5 = arith.constant 0 : index
    %4 = vector.load %arg1[%c0_4, %c2, %c0_5] : memref<1x36x72xbf16, #tpu.memory_space<vmem>>, vector<1x34x72xbf16>
    %5 = vector.shape_cast %4 : vector<1x34x72xbf16> to vector<34x72xbf16>
    %c0_6 = arith.constant 0 : index
    %c0_7 = arith.constant 0 : index
    %c0_8 = arith.constant 0 : index
    %c0_9 = arith.constant 0 : index
    %6 = vector.load %arg2[%c0_6, %c0_7, %c0_8, %c0_9] : memref<2x3x72x64xbf16, #tpu.memory_space<vmem>>, vector<1x1x72x64xbf16>
    %7 = vector.shape_cast %6 : vector<1x1x72x64xbf16> to vector<72x64xbf16>
    %cst = arith.constant dense<0.000000e+00> : vector<34x64xf32>
    %8 = tpu.matmul %1, %7, %cst {dimension_numbers = #tpu.dot_dimension_numbers<[1], [0], [0], [1], [0, 0, 1, 1], [], []>} : vector<34x72xbf16>, vector<72x64xbf16>, vector<34x64xf32> -> vector<34x64xf32>
    %c0_10 = arith.constant 0 : index
    %c1_11 = arith.constant 1 : index
    %c0_12 = arith.constant 0 : index
    %c0_13 = arith.constant 0 : index
    %9 = vector.load %arg2[%c0_10, %c1_11, %c0_12, %c0_13] : memref<2x3x72x64xbf16, #tpu.memory_space<vmem>>, vector<1x1x72x64xbf16>
    %10 = vector.shape_cast %9 : vector<1x1x72x64xbf16> to vector<72x64xbf16>
    %cst_14 = arith.constant dense<0.000000e+00> : vector<34x64xf32>
    %11 = tpu.matmul %3, %10, %cst_14 {dimension_numbers = #tpu.dot_dimension_numbers<[1], [0], [0], [1], [0, 0, 1, 1], [], []>} : vector<34x72xbf16>, vector<72x64xbf16>, vector<34x64xf32> -> vector<34x64xf32>
    %12 = arith.addf %8, %11 : vector<34x64xf32>
    %c0_15 = arith.constant 0 : index
    %c2_16 = arith.constant 2 : index
    %c0_17 = arith.constant 0 : index
    %c0_18 = arith.constant 0 : index
    %13 = vector.load %arg2[%c0_15, %c2_16, %c0_17, %c0_18] : memref<2x3x72x64xbf16, #tpu.memory_space<vmem>>, vector<1x1x72x64xbf16>
    %14 = vector.shape_cast %13 : vector<1x1x72x64xbf16> to vector<72x64xbf16>
    %cst_19 = arith.constant dense<0.000000e+00> : vector<34x64xf32>
    %15 = tpu.matmul %5, %14, %cst_19 {dimension_numbers = #tpu.dot_dimension_numbers<[1], [0], [0], [1], [0, 0, 1, 1], [], []>} : vector<34x72xbf16>, vector<72x64xbf16>, vector<34x64xf32> -> vector<34x64xf32>
    %16 = arith.addf %12, %15 : vector<34x64xf32>
    %c1_20 = arith.constant 1 : index
    %c0_21 = arith.constant 0 : index
    %c0_22 = arith.constant 0 : index
    %c0_23 = arith.constant 0 : index
    %17 = vector.load %arg2[%c1_20, %c0_21, %c0_22, %c0_23] : memref<2x3x72x64xbf16, #tpu.memory_space<vmem>>, vector<1x1x72x64xbf16>
    %18 = vector.shape_cast %17 : vector<1x1x72x64xbf16> to vector<72x64xbf16>
    %cst_24 = arith.constant dense<0.000000e+00> : vector<34x64xf32>
    %19 = tpu.matmul %1, %18, %cst_24 {dimension_numbers = #tpu.dot_dimension_numbers<[1], [0], [0], [1], [0, 0, 1, 1], [], []>} : vector<34x72xbf16>, vector<72x64xbf16>, vector<34x64xf32> -> vector<34x64xf32>
    %c1_25 = arith.constant 1 : index
    %c1_26 = arith.constant 1 : index
    %c0_27 = arith.constant 0 : index
    %c0_28 = arith.constant 0 : index
    %20 = vector.load %arg2[%c1_25, %c1_26, %c0_27, %c0_28] : memref<2x3x72x64xbf16, #tpu.memory_space<vmem>>, vector<1x1x72x64xbf16>
    %21 = vector.shape_cast %20 : vector<1x1x72x64xbf16> to vector<72x64xbf16>
    %cst_29 = arith.constant dense<0.000000e+00> : vector<34x64xf32>
    %22 = tpu.matmul %3, %21, %cst_29 {dimension_numbers = #tpu.dot_dimension_numbers<[1], [0], [0], [1], [0, 0, 1, 1], [], []>} : vector<34x72xbf16>, vector<72x64xbf16>, vector<34x64xf32> -> vector<34x64xf32>
    %23 = arith.addf %19, %22 : vector<34x64xf32>
    %c1_30 = arith.constant 1 : index
    %c2_31 = arith.constant 2 : index
    %c0_32 = arith.constant 0 : index
    %c0_33 = arith.constant 0 : index
    %24 = vector.load %arg2[%c1_30, %c2_31, %c0_32, %c0_33] : memref<2x3x72x64xbf16, #tpu.memory_space<vmem>>, vector<1x1x72x64xbf16>
    %25 = vector.shape_cast %24 : vector<1x1x72x64xbf16> to vector<72x64xbf16>
    %cst_34 = arith.constant dense<0.000000e+00> : vector<34x64xf32>
    %26 = tpu.matmul %5, %25, %cst_34 {dimension_numbers = #tpu.dot_dimension_numbers<[1], [0], [0], [1], [0, 0, 1, 1], [], []>} : vector<34x72xbf16>, vector<72x64xbf16>, vector<34x64xf32> -> vector<34x64xf32>
    %27 = arith.addf %23, %26 : vector<34x64xf32>
    %28 = arith.maximumf %16, %27 : vector<34x64xf32>
    %c0_35 = arith.constant 0 : index
    %c0_36 = arith.constant 0 : index
    %29 = vector.load %arg3[%c0_35, %c0_36] : memref<1x64xf32, #tpu.memory_space<vmem>>, vector<1x64xf32>
    %30 = vector.broadcast %29 : vector<1x64xf32> to vector<34x64xf32>
    %31 = arith.addf %28, %30 : vector<34x64xf32>
    %cst_37 = arith.constant 0.000000e+00 : f32
    %32 = vector.broadcast %cst_37 : f32 to vector<34x64xf32>
    %33 = arith.maximumf %31, %32 : vector<34x64xf32>
    %34 = vector.extract_strided_slice %33 {offsets = [0, 0], sizes = [16, 64], strides = [1, 1]} : vector<34x64xf32> to vector<16x64xf32>
    %35 = vector.shape_cast %34 : vector<16x64xf32> to vector<8x2x64xf32>
    %36 = vector.extract_strided_slice %35 {offsets = [0, 0, 0], sizes = [8, 1, 64], strides = [1, 1, 1]} : vector<8x2x64xf32> to vector<8x1x64xf32>
    %37 = vector.shape_cast %36 : vector<8x1x64xf32> to vector<8x64xf32>
    %38 = vector.extract_strided_slice %35 {offsets = [0, 1, 0], sizes = [8, 1, 64], strides = [1, 1, 1]} : vector<8x2x64xf32> to vector<8x1x64xf32>
    %39 = vector.shape_cast %38 : vector<8x1x64xf32> to vector<8x64xf32>
    %40 = arith.maximumf %37, %39 : vector<8x64xf32>
    %c0_38 = arith.constant 0 : index
    %c0_39 = arith.constant 0 : index
    %c0_40 = arith.constant 0 : index
    %41 = vector.load %arg4[%c0_38, %c0_39, %c0_40] : memref<1x16x64xf32, #tpu.memory_space<vmem>>, vector<1x8x64xf32>
    %42 = vector.shape_cast %41 : vector<1x8x64xf32> to vector<8x64xf32>
    %43 = vector.shape_cast %40 : vector<8x64xf32> to vector<1x8x64xf32>
    tpu.vector_store %arg4[%c0_38, %c0_39, %c0_40], %43 {strides = array<i32>} : memref<1x16x64xf32, #tpu.memory_space<vmem>>, vector<1x8x64xf32>,
    %44 = vector.extract_strided_slice %33 {offsets = [18, 0], sizes = [16, 64], strides = [1, 1]} : vector<34x64xf32> to vector<16x64xf32>
    %45 = vector.shape_cast %44 : vector<16x64xf32> to vector<8x2x64xf32>
    %46 = vector.extract_strided_slice %45 {offsets = [0, 0, 0], sizes = [8, 1, 64], strides = [1, 1, 1]} : vector<8x2x64xf32> to vector<8x1x64xf32>
    %47 = vector.shape_cast %46 : vector<8x1x64xf32> to vector<8x64xf32>
    %48 = vector.extract_strided_slice %45 {offsets = [0, 1, 0], sizes = [8, 1, 64], strides = [1, 1, 1]} : vector<8x2x64xf32> to vector<8x1x64xf32>
    %49 = vector.shape_cast %48 : vector<8x1x64xf32> to vector<8x64xf32>
    %50 = arith.maximumf %47, %49 : vector<8x64xf32>
    %c0_41 = arith.constant 0 : index
    %c8 = arith.constant 8 : index
    %c0_42 = arith.constant 0 : index
    %51 = vector.load %arg4[%c0_41, %c8, %c0_42] : memref<1x16x64xf32, #tpu.memory_space<vmem>>, vector<1x8x64xf32>
    %52 = vector.shape_cast %51 : vector<1x8x64xf32> to vector<8x64xf32>
    %53 = vector.shape_cast %50 : vector<8x64xf32> to vector<1x8x64xf32>
    tpu.vector_store %arg4[%c0_41, %c8, %c0_42], %53 {strides = array<i32>} : memref<1x16x64xf32, #tpu.memory_space<vmem>>, vector<1x8x64xf32>,
    return
  }
  func.func @transform_0(%arg0: i32) -> (i32, i32, i32) {
    %c0_i32 = arith.constant 0 : i32
    %c0_i32_0 = arith.constant 0 : i32
    %c0_i32_1 = arith.constant 0 : i32
    return %arg0, %c0_i32, %c0_i32_0 : i32, i32, i32
  }
  func.func @transform_1(%arg0: i32) -> (i32, i32, i32, i32) {
    %c0_i32 = arith.constant 0 : i32
    %c0_i32_0 = arith.constant 0 : i32
    %c0_i32_1 = arith.constant 0 : i32
    %c0_i32_2 = arith.constant 0 : i32
    %c0_i32_3 = arith.constant 0 : i32
    return %c0_i32, %c0_i32_0, %c0_i32_1, %c0_i32_2 : i32, i32, i32, i32
  }
  func.func @transform_2(%arg0: i32) -> (i32, i32) {
    %c0_i32 = arith.constant 0 : i32
    %c0_i32_0 = arith.constant 0 : i32
    %c0_i32_1 = arith.constant 0 : i32
    return %c0_i32, %c0_i32_0 : i32, i32
  }
  func.func @transform_3(%arg0: i32) -> (i32, i32, i32) {
    %c0_i32 = arith.constant 0 : i32
    %c0_i32_0 = arith.constant 0 : i32
    %c0_i32_1 = arith.constant 0 : i32
    return %arg0, %c0_i32, %c0_i32_0 : i32, i32, i32
  }
}

</mosaic_0001>

<llo_original>
// kernel: down_conv_block.1
$region0: #{down_conv_block.1}
  #allocation0 [shape = 'u32[]', space=smem, size = 0x4, offset = 0x4, fixed_abs, tag = 'smem constant byte address 0x4 - core index']
  #allocation1 [shape = 'u32[72,128]{1,0:T(1,128)}', space=vmem, size = 0x9000, scoped, tag = 'internal scratch']
  %s0 = inlined_call_operand.vmem [shape: bf16[1,36,72], index: 0, kind: input, shape index: {}]
  %s1 = inlined_call_operand.vmem [shape: bf16[2,3,72,64], index: 1, kind: input, shape index: {}]
  %s2 = inlined_call_operand.vmem [shape: f32[1,64], index: 2, kind: input, shape index: {}]
  %s3 = inlined_call_operand.vmem [shape: f32[1,16,64], index: 3, kind: output, shape index: {}]
  %s4 = sld [smem:[#allocation0]]
  $region22: #{down_conv_block.1} parent=0
    _
  %s6 = ssub.s32 1, %s4
  %s7 = scalar_select 0, %s6, %s4
  // Predicated region
  $region2: #{down_conv_block.1} parent=0 // pred_check
    _
  $region3: #{down_conv_block.1} parent=0 // pred_check_branch
    %9 = sbr.rel (0) target = $region5
  $region4: #{down_conv_block.1} parent=0 // pred_region
    _
  $region5: #{down_conv_block.1} parent=0 // pred_fallthru
    _
  // Predicated region
  $region6: #{down_conv_block.1} parent=0 // pred_check
    _
  $region7: #{down_conv_block.1} parent=0 // pred_check_branch
    %11 = sbr.rel (0) target = $region9
  $region8: #{down_conv_block.1} parent=0 // pred_region
    _
  $region9: #{down_conv_block.1} parent=0 // pred_fallthru
    _
  // Predicated region
  $region10: #{down_conv_block.1} parent=0 // pred_check
    _
  $region11: #{down_conv_block.1} parent=0 // pred_check_branch
    %13 = sbr.rel (0) target = $region13
  $region12: #{down_conv_block.1} parent=0 // pred_region
    _
  $region13: #{down_conv_block.1} parent=0 // pred_fallthru
    _
  %v15 = vld [vmem:[%s0] sm:$0xf]
  %v16 = vld [vmem:[%s0 + $0x4] sm:$0xf]
  %v17 = vld [vmem:[%s0 + $0x8] sm:$0xf]
  %v18 = vld [vmem:[%s0 + $0xc] sm:$0xf]
  %v19 = vld [vmem:[%s0 + $0x10] sm:$0x1]
  %v20 = vld [vmem:[%s0 + $0x10] sm:$0x3]
  %v21 = vld [vmem:[%s0] sm:$0xe]
  %v22 = vld [vmem:[%s1] sm:$0xf]
  %v23 = vld [vmem:[%s1 + $0x4] sm:$0xf]
  %v24 = vld [vmem:[%s1 + $0x8] sm:$0xf]
  %v25 = vld [vmem:[%s1 + $0xc] sm:$0xf]
  %v26 = vld [vmem:[%s1 + $0x10] sm:$0xf]
  %v27 = vld [vmem:[%s1 + $0x14] sm:$0xf]
  %v28 = vld [vmem:[%s1 + $0x18] sm:$0xf]
  %v29 = vld [vmem:[%s1 + $0x1c] sm:$0xf]
  %v30 = vld [vmem:[%s1 + $0x20] sm:$0xf]
  %s31 = scalar_lea.vmem %s1, 36
  %v32 = vld [vmem:[%s31] sm:$0xf]
  %v33 = vld [vmem:[%s31 + $0x4] sm:$0xf]
  %v34 = vld [vmem:[%s31 + $0x8] sm:$0xf]
  %v35 = vld [vmem:[%s31 + $0xc] sm:$0xf]
  %v36 = vld [vmem:[%s31 + $0x10] sm:$0xf]
  %v37 = vld [vmem:[%s31 + $0x14] sm:$0xf]
  %v38 = vld [vmem:[%s31 + $0x18] sm:$0xf]
  %v39 = vld [vmem:[%s31 + $0x1c] sm:$0xf]
  %v40 = vld [vmem:[%s31 + $0x20] sm:$0xf]
  %v46 = vunpack.c.l.b16 %v15
  %v47 = vunpack.c.l.b16 %v16
  %v48 = vunpack.c.l.b16 %v17
  %v49 = vunpack.c.l.b16 %v18
  %v50 = vunpack.c.l.b16 %v20
  %v51 = vpack.c.b16 %v47, %v46
  %v52 = vpack.c.b16 %v49, %v48
  %v53 = vpack.c.b16 %v50, %v50
  %vm54 = vsmask.f32 7424
  %v56 = vshrl.u32 %v51, 16
  %v58 = vshll.u32 %v51, 16
  %v60 = vrot.slane %v58, 1
  %v61 = vor.u32 %v56, %v60
  %v63 = vshll.u32 %v52, 16
  %v65 = vrot.slane %v63, 1
  %v66 = vsel %vm54, %v61, %v65
  %v67 = vshrl.u32 %v52, 16
  %v69 = vor.u32 %v67, %v65
  %v71 = vshll.u32 %v53, 16
  %v73 = vrot.slane %v71, 1
  %v74 = vsel %vm54, %v69, %v73
  %v75 = vshrl.u32 %v53, 16
  %v77 = vor.u32 %v75, %v73
  %v87 = vunpack.c.l.b16 %v32
  %v88 = vunpack.c.l.b16 %v33
  %v89 = vunpack.c.l.b16 %v34
  %v90 = vunpack.c.l.b16 %v35
  %v91 = vunpack.c.l.b16 %v36
  %v92 = vunpack.c.l.b16 %v37
  %v93 = vunpack.c.l.b16 %v38
  %v94 = vunpack.c.l.b16 %v39
  %v95 = vunpack.c.l.b16 %v40
  %v96 = vpack.c.b16 %v88, %v87
  %v97 = vpack.c.b16 %v90, %v89
  %v98 = vpack.c.b16 %v92, %v91
  %v99 = vpack.c.b16 %v94, %v93
  %v100 = vpack.c.b16 %v95, %v95
  %vm105 = vcmask 588800
  %v107 = vsel %vm105, %v66, 0
  %v110 = vsel %vm105, %v74, 0
  %v113 = vsel %vm105, %v77, 0
  %vm115 = vcmask 1043456
  %v117 = vsel %vm115, %v100, 0
  %119 = vmatpush.bf16.msra.mxu0 0
  %120 = vmatpush.bf16.msra.mxu0 0
  %121 = vmatpush.bf16.msra.mxu0 0
  %122 = vmatpush.bf16.msra.mxu0 %v117
  %123 = vmatpush.bf16.msra.mxu0 %v99
  %124 = vmatpush.bf16.msra.mxu0 %v98
  %125 = vmatpush.bf16.msra.mxu0 %v97
  %126 = vmatpush.bf16.msra.mxu0 %v96
  %127 = vmatmul.bf16.gmra.mxu0 %v107
  %v128 = vpop.f32.mrf.mxu0
  %v129 = vadd.f32 0.0, %v128
  %v130 = vpop.f32.mrf.mxu0
  %v131 = vadd.f32 0.0, %v130
  %132 = vmatmul.bf16.gmra.mxu0 %v110
  %v133 = vpop.f32.mrf.mxu0
  %v134 = vadd.f32 0.0, %v133
  %v135 = vpop.f32.mrf.mxu0
  %v136 = vadd.f32 0.0, %v135
  %137 = vmatmul.bf16.gmra.mxu0 %v113
  %v138 = vpop.f32.mrf.mxu0
  %v139 = vadd.f32 0.0, %v138
  %v140 = vpop.f32.mrf.mxu0
  %141 = vdwg.mxu0
  %v143 = vunpack.c.l.b16 %v19
  %v144 = vpack.c.b16 %v143, %v143
  %v154 = vunpack.c.l.b16 %v22
  %v155 = vunpack.c.l.b16 %v23
  %v156 = vunpack.c.l.b16 %v24
  %v157 = vunpack.c.l.b16 %v25
  %v158 = vunpack.c.l.b16 %v26
  %v159 = vunpack.c.l.b16 %v27
  %v160 = vunpack.c.l.b16 %v28
  %v161 = vunpack.c.l.b16 %v29
  %v162 = vunpack.c.l.b16 %v30
  %v163 = vpack.c.b16 %v155, %v154
  %v164 = vpack.c.b16 %v157, %v156
  %v165 = vpack.c.b16 %v159, %v158
  %v166 = vpack.c.b16 %v161, %v160
  %v167 = vpack.c.b16 %v162, %v162
  %v172 = vsel %vm105, %v51, 0
  %v174 = vsel %vm105, %v52, 0
  %v177 = vsel %vm105, %v144, 0
  %v180 = vsel %vm115, %v167, 0
  %182 = vmatpush.bf16.msra.mxu0 0
  %183 = vmatpush.bf16.msra.mxu0 0
  %184 = vmatpush.bf16.msra.mxu0 0
  %185 = vmatpush.bf16.msra.mxu0 %v180
  %186 = vmatpush.bf16.msra.mxu0 %v166
  %187 = vmatpush.bf16.msra.mxu0 %v165
  %188 = vmatpush.bf16.msra.mxu0 %v164
  %189 = vmatpush.bf16.msra.mxu0 %v163
  %190 = vmatmul.bf16.gmra.mxu0 %v172
  %v191 = vpop.f32.mrf.mxu0
  %v192 = vadd.f32 %v129, %v191
  %v193 = vpop.f32.mrf.mxu0
  %v194 = vadd.f32 %v131, %v193
  %195 = vmatmul.bf16.gmra.mxu0 %v174
  %v196 = vpop.f32.mrf.mxu0
  %v197 = vadd.f32 %v134, %v196
  %v198 = vpop.f32.mrf.mxu0
  %v199 = vadd.f32 %v136, %v198
  %200 = vmatmul.bf16.gmra.mxu0 %v177
  %v201 = vpop.f32.mrf.mxu0
  %v202 = vadd.f32 %v139, %v201
  %v203 = vpop.f32.mrf.mxu0
  %204 = vdwg.mxu0
  %s205 = scalar_lea.vmem %s1, 72
  %v206 = vld [vmem:[%s205] sm:$0xf]
  %v207 = vld [vmem:[%s205 + $0x4] sm:$0xf]
  %v208 = vld [vmem:[%s205 + $0x8] sm:$0xf]
  %v209 = vld [vmem:[%s205 + $0xc] sm:$0xf]
  %v210 = vld [vmem:[%s205 + $0x10] sm:$0xf]
  %v211 = vld [vmem:[%s205 + $0x14] sm:$0xf]
  %v212 = vld [vmem:[%s205 + $0x18] sm:$0xf]
  %v213 = vld [vmem:[%s205 + $0x1c] sm:$0xf]
  %v214 = vld [vmem:[%s205 + $0x20] sm:$0xf]
  %v216 = vunpack.c.l.b16 %v21
  %v217 = vpack.c.b16 %v47, %v216
  %vm218 = vcmask 1046528
  %v219 = vrot.slane %v217, 1
  %v220 = vrot.slane %v52, 1
  %v221 = vsel %vm218, %v219, %v220
  %v222 = vrot.slane %v53, 1
  %v223 = vsel %vm218, %v220, %v222
  %v233 = vunpack.c.l.b16 %v206
  %v234 = vunpack.c.l.b16 %v207
  %v235 = vunpack.c.l.b16 %v208
  %v236 = vunpack.c.l.b16 %v209
  %v237 = vunpack.c.l.b16 %v210
  %v238 = vunpack.c.l.b16 %v211
  %v239 = vunpack.c.l.b16 %v212
  %v240 = vunpack.c.l.b16 %v213
  %v241 = vunpack.c.l.b16 %v214
  %v242 = vpack.c.b16 %v234, %v233
  %v243 = vpack.c.b16 %v236, %v235
  %v244 = vpack.c.b16 %v238, %v237
  %v245 = vpack.c.b16 %v240, %v239
  %v246 = vpack.c.b16 %v241, %v241
  %v252 = vsel %vm105, %v221, 0
  %v255 = vsel %vm105, %v223, 0
  %v258 = vsel %vm105, %v222, 0
  %v261 = vsel %vm115, %v246, 0
  %263 = vmatpush.bf16.msra.mxu0 0
  %264 = vmatpush.bf16.msra.mxu0 0
  %265 = vmatpush.bf16.msra.mxu0 0
  %266 = vmatpush.bf16.msra.mxu0 %v261
  %267 = vmatpush.bf16.msra.mxu0 %v245
  %268 = vmatpush.bf16.msra.mxu0 %v244
  %269 = vmatpush.bf16.msra.mxu0 %v243
  %270 = vmatpush.bf16.msra.mxu0 %v242
  %271 = vmatmul.bf16.gmra.mxu0 %v252
  %v272 = vpop.f32.mrf.mxu0
  %v273 = vadd.f32 0.0, %v272
  %v274 = vpop.f32.mrf.mxu0
  %v275 = vadd.f32 0.0, %v274
  %276 = vmatmul.bf16.gmra.mxu0 %v255
  %v277 = vpop.f32.mrf.mxu0
  %v278 = vadd.f32 0.0, %v277
  %v279 = vpop.f32.mrf.mxu0
  %v280 = vadd.f32 0.0, %v279
  %281 = vmatmul.bf16.gmra.mxu0 %v258
  %v282 = vpop.f32.mrf.mxu0
  %v283 = vadd.f32 0.0, %v282
  %v284 = vpop.f32.mrf.mxu0
  %285 = vdwg.mxu0
  %v286 = vadd.f32 %v192, %v273
  %v287 = vadd.f32 %v194, %v275
  %v288 = vadd.f32 %v197, %v278
  %v289 = vadd.f32 %v199, %v280
  %v290 = vadd.f32 %v202, %v283
  %s291 = scalar_lea.vmem %s1, 108
  %v292 = vld [vmem:[%s291] sm:$0xf]
  %v293 = vld [vmem:[%s291 + $0x4] sm:$0xf]
  %v294 = vld [vmem:[%s291 + $0x8] sm:$0xf]
  %v295 = vld [vmem:[%s291 + $0xc] sm:$0xf]
  %v296 = vld [vmem:[%s291 + $0x10] sm:$0xf]
  %v297 = vld [vmem:[%s291 + $0x14] sm:$0xf]
  %v298 = vld [vmem:[%s291 + $0x18] sm:$0xf]
  %v299 = vld [vmem:[%s291 + $0x1c] sm:$0xf]
  %v300 = vld [vmem:[%s291 + $0x20] sm:$0xf]
  %s301 = scalar_lea.vmem %s1, 144
  %v302 = vld [vmem:[%s301] sm:$0xf]
  %v303 = vld [vmem:[%s301 + $0x4] sm:$0xf]
  %v304 = vld [vmem:[%s301 + $0x8] sm:$0xf]
  %v305 = vld [vmem:[%s301 + $0xc] sm:$0xf]
  %v306 = vld [vmem:[%s301 + $0x10] sm:$0xf]
  %v307 = vld [vmem:[%s301 + $0x14] sm:$0xf]
  %v308 = vld [vmem:[%s301 + $0x18] sm:$0xf]
  %v309 = vld [vmem:[%s301 + $0x1c] sm:$0xf]
  %v310 = vld [vmem:[%s301 + $0x20] sm:$0xf]
  %v320 = vunpack.c.l.b16 %v302
  %v321 = vunpack.c.l.b16 %v303
  %v322 = vunpack.c.l.b16 %v304
  %v323 = vunpack.c.l.b16 %v305
  %v324 = vunpack.c.l.b16 %v306
  %v325 = vunpack.c.l.b16 %v307
  %v326 = vunpack.c.l.b16 %v308
  %v327 = vunpack.c.l.b16 %v309
  %v328 = vunpack.c.l.b16 %v310
  %v329 = vpack.c.b16 %v321, %v320
  %v330 = vpack.c.b16 %v323, %v322
  %v331 = vpack.c.b16 %v325, %v324
  %v332 = vpack.c.b16 %v327, %v326
  %v333 = vpack.c.b16 %v328, %v328
  %v339 = vsel %vm115, %v333, 0
  %341 = vmatpush.bf16.msra.mxu0 0
  %342 = vmatpush.bf16.msra.mxu0 0
  %343 = vmatpush.bf16.msra.mxu0 0
  %344 = vmatpush.bf16.msra.mxu0 %v339
  %345 = vmatpush.bf16.msra.mxu0 %v332
  %346 = vmatpush.bf16.msra.mxu0 %v331
  %347 = vmatpush.bf16.msra.mxu0 %v330
  %348 = vmatpush.bf16.msra.mxu0 %v329
  %349 = vmatmul.bf16.gmra.mxu0 %v107
  %v350 = vpop.f32.mrf.mxu0
  %v351 = vadd.f32 0.0, %v350
  %v352 = vpop.f32.mrf.mxu0
  %v353 = vadd.f32 0.0, %v352
  %354 = vmatmul.bf16.gmra.mxu0 %v110
  %v355 = vpop.f32.mrf.mxu0
  %v356 = vadd.f32 0.0, %v355
  %v357 = vpop.f32.mrf.mxu0
  %v358 = vadd.f32 0.0, %v357
  %359 = vmatmul.bf16.gmra.mxu0 %v113
  %v360 = vpop.f32.mrf.mxu0
  %v361 = vadd.f32 0.0, %v360
  %v362 = vpop.f32.mrf.mxu0
  %363 = vdwg.mxu0
  %v373 = vunpack.c.l.b16 %v292
  %v374 = vunpack.c.l.b16 %v293
  %v375 = vunpack.c.l.b16 %v294
  %v376 = vunpack.c.l.b16 %v295
  %v377 = vunpack.c.l.b16 %v296
  %v378 = vunpack.c.l.b16 %v297
  %v379 = vunpack.c.l.b16 %v298
  %v380 = vunpack.c.l.b16 %v299
  %v381 = vunpack.c.l.b16 %v300
  %v382 = vpack.c.b16 %v374, %v373
  %v383 = vpack.c.b16 %v376, %v375
  %v384 = vpack.c.b16 %v378, %v377
  %v385 = vpack.c.b16 %v380, %v379
  %v386 = vpack.c.b16 %v381, %v381
  %v392 = vsel %vm115, %v386, 0
  %394 = vmatpush.bf16.msra.mxu0 0
  %395 = vmatpush.bf16.msra.mxu0 0
  %396 = vmatpush.bf16.msra.mxu0 0
  %397 = vmatpush.bf16.msra.mxu0 %v392
  %398 = vmatpush.bf16.msra.mxu0 %v385
  %399 = vmatpush.bf16.msra.mxu0 %v384
  %400 = vmatpush.bf16.msra.mxu0 %v383
  %401 = vmatpush.bf16.msra.mxu0 %v382
  %402 = vmatmul.bf16.gmra.mxu0 %v172
  %v403 = vpop.f32.mrf.mxu0
  %v404 = vadd.f32 %v351, %v403
  %v405 = vpop.f32.mrf.mxu0
  %v406 = vadd.f32 %v353, %v405
  %407 = vmatmul.bf16.gmra.mxu0 %v174
  %v408 = vpop.f32.mrf.mxu0
  %v409 = vadd.f32 %v356, %v408
  %v410 = vpop.f32.mrf.mxu0
  %v411 = vadd.f32 %v358, %v410
  %412 = vmatmul.bf16.gmra.mxu0 %v177
  %v413 = vpop.f32.mrf.mxu0
  %v414 = vadd.f32 %v361, %v413
  %v415 = vpop.f32.mrf.mxu0
  %416 = vdwg.mxu0
  %s417 = scalar_lea.vmem %s1, 180
  %v418 = vld [vmem:[%s417] sm:$0xf]
  %v419 = vld [vmem:[%s417 + $0x4] sm:$0xf]
  %v420 = vld [vmem:[%s417 + $0x8] sm:$0xf]
  %v421 = vld [vmem:[%s417 + $0xc] sm:$0xf]
  %v422 = vld [vmem:[%s417 + $0x10] sm:$0xf]
  %v423 = vld [vmem:[%s417 + $0x14] sm:$0xf]
  %v424 = vld [vmem:[%s417 + $0x18] sm:$0xf]
  %v425 = vld [vmem:[%s417 + $0x1c] sm:$0xf]
  %v426 = vld [vmem:[%s417 + $0x20] sm:$0xf]
  %v436 = vunpack.c.l.b16 %v418
  %v437 = vunpack.c.l.b16 %v419
  %v438 = vunpack.c.l.b16 %v420
  %v439 = vunpack.c.l.b16 %v421
  %v440 = vunpack.c.l.b16 %v422
  %v441 = vunpack.c.l.b16 %v423
  %v442 = vunpack.c.l.b16 %v424
  %v443 = vunpack.c.l.b16 %v425
  %v444 = vunpack.c.l.b16 %v426
  %v445 = vpack.c.b16 %v437, %v436
  %v446 = vpack.c.b16 %v439, %v438
  %v447 = vpack.c.b16 %v441, %v440
  %v448 = vpack.c.b16 %v443, %v442
  %v449 = vpack.c.b16 %v444, %v444
  %v455 = vsel %vm115, %v449, 0
  %457 = vmatpush.bf16.msra.mxu0 0
  %458 = vmatpush.bf16.msra.mxu0 0
  %459 = vmatpush.bf16.msra.mxu0 0
  %460 = vmatpush.bf16.msra.mxu0 %v455
  %461 = vmatpush.bf16.msra.mxu0 %v448
  %462 = vmatpush.bf16.msra.mxu0 %v447
  %463 = vmatpush.bf16.msra.mxu0 %v446
  %464 = vmatpush.bf16.msra.mxu0 %v445
  %465 = vmatmul.bf16.gmra.mxu0 %v252
  %v466 = vpop.f32.mrf.mxu0
  %v467 = vadd.f32 0.0, %v466
  %v468 = vpop.f32.mrf.mxu0
  %v469 = vadd.f32 0.0, %v468
  %470 = vmatmul.bf16.gmra.mxu0 %v255
  %v471 = vpop.f32.mrf.mxu0
  %v472 = vadd.f32 0.0, %v471
  %v473 = vpop.f32.mrf.mxu0
  %v474 = vadd.f32 0.0, %v473
  %475 = vmatmul.bf16.gmra.mxu0 %v258
  %v476 = vpop.f32.mrf.mxu0
  %v477 = vadd.f32 0.0, %v476
  %v478 = vpop.f32.mrf.mxu0
  %479 = vdwg.mxu0
  %v480 = vadd.f32 %v404, %v467
  %v481 = vadd.f32 %v406, %v469
  %v482 = vadd.f32 %v409, %v472
  %v483 = vadd.f32 %v411, %v474
  %v484 = vadd.f32 %v414, %v477
  %v485 = vmax.f32 %v286, %v480
  %v486 = vmax.f32 %v287, %v481
  %v487 = vmax.f32 %v288, %v482
  %v488 = vmax.f32 %v289, %v483
  %v489 = vmax.f32 %v290, %v484
  %v490 = vld [vmem:[%s2] sm:$0x1]
  %v492 = vperm.slane %v490, 0
  %v494 = vadd.f32 %v485, %v492
  %v495 = vadd.f32 %v486, %v492
  %v496 = vadd.f32 %v487, %v492
  %v497 = vadd.f32 %v488, %v492
  %v498 = vadd.f32 %v489, %v492
  %v499 = vmax.f32 %v494, 0.0
  %v500 = vmax.f32 %v495, 0.0
  %v501 = vmax.f32 %v496, 0.0
  %v502 = vmax.f32 %v497, 0.0
  %v503 = vmax.f32 %v498, 0.0
  %v506 = vrot.slane %v499, 2
  %v507 = vrot.slane %v499, 4
  %v508 = vrot.slane %v499, 6
  %v509 = vrot.slane %v500, 2
  %v510 = vrot.slane %v500, 4
  %v511 = vrot.slane %v500, 6
  %v518 = vrot.slane %v499, 7
  %v519 = vrot.slane %v518, 2
  %v520 = vrot.slane %v506, 7
  %v521 = vrot.slane %v520, 2
  %v522 = vrot.slane %v507, 7
  %v523 = vrot.slane %v522, 2
  %v524 = vrot.slane %v508, 7
  %v525 = vrot.slane %v524, 2
  %v526 = vrot.slane %v500, 7
  %v527 = vrot.slane %v526, 2
  %v528 = vrot.slane %v509, 7
  %v529 = vrot.slane %v528, 2
  %v530 = vrot.slane %v510, 7
  %v531 = vrot.slane %v530, 2
  %v532 = vrot.slane %v511, 7
  %v533 = vrot.slane %v532, 2
  %v542 = vmax.f32 %v499, %v519
  %v543 = vmax.f32 %v506, %v521
  %v544 = vmax.f32 %v507, %v523
  %v545 = vmax.f32 %v508, %v525
  %v546 = vmax.f32 %v500, %v527
  %v547 = vmax.f32 %v509, %v529
  %v548 = vmax.f32 %v510, %v531
  %v549 = vmax.f32 %v511, %v533
  %v558 = vperm.slane %v542, 0
  %v559 = vperm.slane %v543, 0
  %v560 = vperm.slane %v544, 0
  %v561 = vperm.slane %v545, 0
  %v562 = vperm.slane %v546, 0
  %v563 = vperm.slane %v547, 0
  %v564 = vperm.slane %v548, 0
  %v565 = vperm.slane %v549, 0
  %vm566 = vcmask 1041409
  %v567 = vsel %vm566, %v559, %v558
  %vm568 = vcmask 1042434
  %v569 = vsel %vm568, %v560, %v567
  %vm570 = vcmask 1043459
  %v571 = vsel %vm570, %v561, %v569
  %vm572 = vcmask 1044484
  %v573 = vsel %vm572, %v562, %v571
  %vm574 = vcmask 1045509
  %v575 = vsel %vm574, %v563, %v573
  %vm576 = vcmask 1046534
  %v577 = vsel %vm576, %v564, %v575
  %vm578 = vcmask 1047559
  %v579 = vsel %vm578, %v565, %v577
  %vm581 = vcmask 523264
  %582 = vst.msk [vmem:[%s3] sm:$0xff] %vm581, %v579
  %586 = vst.sshfl [vmem:[#allocation1] sm:$0xff pattern:$0x73625140] %v501
  %587 = vst.sshfl [vmem:[#allocation1 + $0x20] sm:$0xff pattern:$0x73625140] %v502
  %s588 = scalar_lea.vmem [#allocation1], 1
  %v589 = vld [vmem:[%s588] ss:$4 sm:$0xff]
  %s590 = scalar_lea.vmem [#allocation1], 2
  %v591 = vld [vmem:[%s590] ss:$4 sm:$0xff]
  %s592 = scalar_lea.vmem [#allocation1], 3
  %v593 = vld [vmem:[%s592] ss:$4 sm:$0xff]
  %s594 = scalar_lea.vmem [#allocation1], 32
  %v595 = vld [vmem:[%s594] ss:$4 sm:$0xff]
  %s596 = scalar_lea.vmem [#allocation1], 33
  %v597 = vld [vmem:[%s596] ss:$4 sm:$0xff]
  %s598 = scalar_lea.vmem [#allocation1], 34
  %v599 = vld [vmem:[%s598] ss:$4 sm:$0xff]
  %s600 = scalar_lea.vmem [#allocation1], 35
  %v601 = vld [vmem:[%s600] ss:$4 sm:$0xff]
  %602 = vst.sshfl [vmem:[#allocation1] sm:$0xff pattern:$0x73625140] %v503
  %v603 = vld [vmem:[#allocation1] ss:$4 sm:$0xff]
  %v612 = vrot.slane %v589, 7
  %v613 = vrot.slane %v612, 2
  %v614 = vrot.slane %v591, 7
  %v615 = vrot.slane %v614, 2
  %v616 = vrot.slane %v593, 7
  %v617 = vrot.slane %v616, 2
  %v618 = vrot.slane %v595, 7
  %v619 = vrot.slane %v618, 2
  %v620 = vrot.slane %v597, 7
  %v621 = vrot.slane %v620, 2
  %v622 = vrot.slane %v599, 7
  %v623 = vrot.slane %v622, 2
  %v624 = vrot.slane %v601, 7
  %v625 = vrot.slane %v624, 2
  %v626 = vrot.slane %v603, 7
  %v627 = vrot.slane %v626, 2
  %v636 = vmax.f32 %v589, %v613
  %v637 = vmax.f32 %v591, %v615
  %v638 = vmax.f32 %v593, %v617
  %v639 = vmax.f32 %v595, %v619
  %v640 = vmax.f32 %v597, %v621
  %v641 = vmax.f32 %v599, %v623
  %v642 = vmax.f32 %v601, %v625
  %v643 = vmax.f32 %v603, %v627
  %v652 = vperm.slane %v636, 0
  %v653 = vperm.slane %v637, 0
  %v654 = vperm.slane %v638, 0
  %v655 = vperm.slane %v639, 0
  %v656 = vperm.slane %v640, 0
  %v657 = vperm.slane %v641, 0
  %v658 = vperm.slane %v642, 0
  %v659 = vperm.slane %v643, 0
  %v660 = vsel %vm566, %v653, %v652
  %v661 = vsel %vm568, %v654, %v660
  %v662 = vsel %vm570, %v655, %v661
  %v663 = vsel %vm572, %v656, %v662
  %v664 = vsel %vm574, %v657, %v663
  %v665 = vsel %vm576, %v658, %v664
  %v666 = vsel %vm578, %v659, %v665
  %668 = vst.msk [vmem:[%s3 + $0x8] sm:$0xff] %vm581, %v666
  // Predicated region
  $region14: #{down_conv_block.1} parent=0 // pred_check
    _
  $region15: #{down_conv_block.1} parent=0 // pred_check_branch
    %670 = sbr.rel (0) target = $region17
  $region16: #{down_conv_block.1} parent=0 // pred_region
    _
  $region17: #{down_conv_block.1} parent=0 // pred_fallthru
    _
  // Predicated region
  $region18: #{down_conv_block.1} parent=0 // pred_check
    _
  $region19: #{down_conv_block.1} parent=0 // pred_check_branch
    %672 = sbr.rel (0) target = $region21
  $region20: #{down_conv_block.1} parent=0 // pred_region
    _
  $region21: #{down_conv_block.1} parent=0 // pred_fallthru
    _

</llo_original>
